<compile_context>
chip_gen: v5e
topology: v5e:2x2
jax: 0.10.0
libtpu: 0.0.40
codegen_flags: <defaults>
</compile_context>

<pallas_src>
import jax
import jax.numpy as jnp
from jax.experimental import pallas as pl
from jax.experimental.pallas import tpu as pltpu

LANE = 128
SUBLANE = 8


# ---------------------------------------------------------------------------
# Fused kernel: GT-embed + ReLU -> lin1 + ReLU -> lin2 -> softmax
# ---------------------------------------------------------------------------
def dbpmlp_fused_kernel(x_ref, wgt_ref, bgt_ref, w1_ref, b1_ref, w2_ref,
                        b2_ref, o_ref):
    # GraphTransformer stand-in + ReLU (dropout is identity in eval mode).
    # bf16 x bf16 on the MXU with f32 accumulation.
    x0 = jnp.dot(x_ref[...], wgt_ref[...], preferred_element_type=jnp.float32)
    x0 = jnp.maximum(x0 + bgt_ref[...], 0.0)

    # lin1 + ReLU (activations stay f32; upcast the bf16 weights).
    x1 = jnp.dot(x0, w1_ref[...].astype(jnp.float32),
                 preferred_element_type=jnp.float32)
    x1 = jnp.maximum(x1 + b1_ref[...], 0.0)

    # lin2
    x2 = jnp.dot(x1, w2_ref[...].astype(jnp.float32),
                 preferred_element_type=jnp.float32)
    x2 = x2 + b2_ref[...]

    # Row softmax over the real out_dim lanes (exact normalization).
    m = jnp.max(x2, axis=-1, keepdims=True)
    e = jnp.exp(x2 - m)
    o_ref[...] = (e / jnp.sum(e, axis=-1, keepdims=True)).astype(o_ref.dtype)


# ---------------------------------------------------------------------------
# Wrapper: bf16 I/O, row tiling over a parallel grid, weights resident in VMEM
# ---------------------------------------------------------------------------
def _round_up(v, m):
    return (v + m - 1) // m * m


def dbpmlp_forward(x, walks, deg, params, *, out_dim, tm=512):
    """Fused DBPMLP forward.  walks / deg are accepted for API fidelity but
    unused by the GraphTransformer stand-in."""
    del walks, deg
    n, in_dim = x.shape
    hidden = params["w_gt"].shape[1]
    mid = params["w1"].shape[1]  # 2 * out_dim

    # Row tiling: sublane aligned, and capped so the grid has >= 2 steps
    # (megacore sharding of the "parallel" axis on v7x; harmless on v5e/v6e).
    n_sub = _round_up(n, SUBLANE)
    tm_cap = _round_up((n_sub + 1) // 2, SUBLANE)
    tm = _round_up(max(SUBLANE, min(tm, tm_cap)), SUBLANE)
    n_p = _round_up(n_sub, tm)

    # bf16 for the large / matmul operands; biases stay f32 (post-matmul add).
    xp = x.astype(jnp.bfloat16)
    if n_p > n:
        xp = jnp.pad(xp, ((0, n_p - n), (0, 0)))   # row pad only (16 cols, cheap)
    wgt = params["w_gt"].astype(jnp.bfloat16)
    w1 = params["w1"].astype(jnp.bfloat16)
    w2 = params["w2"].astype(jnp.bfloat16)
    bgt = params["b_gt"].reshape(1, hidden).astype(jnp.float32)
    b1 = params["b1"].reshape(1, mid).astype(jnp.float32)
    b2 = params["b2"].reshape(1, out_dim).astype(jnp.float32)

    grid = (n_p // tm,)

    def resident(a):
        # grid-invariant operand: whole (tiny) array, same block every step
        return pl.BlockSpec(a.shape, lambda i: (0, 0))

    out = pl.pallas_call(
        dbpmlp_fused_kernel,
        out_shape=jax.ShapeDtypeStruct((n_p, out_dim), jnp.float32),
        grid=grid,
        in_specs=[
            pl.BlockSpec((tm, in_dim), lambda i: (i, 0)),   # x row tile (bf16)
            resident(wgt), resident(bgt),                   # GT stand-in
            resident(w1), resident(b1),                     # lin1
            resident(w2), resident(b2),                     # lin2
        ],
        out_specs=pl.BlockSpec((tm, out_dim), lambda i: (i, 0)),
        compiler_params=pltpu.CompilerParams(
            dimension_semantics=("parallel",),
            vmem_limit_bytes=32 * 1024 * 1024),
    )(xp, wgt, bgt, w1, b1, w2, b2)

    return out[:n]


# ---------------------------------------------------------------------------
# Pure-JAX reference (for correctness check)
# ---------------------------------------------------------------------------
def dbpmlp_reference(x, params):
    x0 = jnp.maximum(x @ params["w_gt"] + params["b_gt"].reshape(1, -1), 0.0)
    x1 = jnp.maximum(x0 @ params["w1"] + params["b1"].reshape(1, -1), 0.0)
    x2 = x1 @ params["w2"] + params["b2"].reshape(1, -1)
    return jax.nn.softmax(x2, axis=-1)


def glorot(key, fan_in, fan_out):
    lim = (6.0 / (fan_in + fan_out)) ** 0.5
    return jax.random.uniform(key, (fan_in, fan_out), jnp.float32, -lim, lim)


# ---------------------------------------------------------------------------
if __name__ == "__main__":
    # Small shapes consistent with the module's constructor.
    num_nodes = 256
    in_dim = 16
    hidden_dim = 32
    out_dim = 4
    num_walks, walks_length = 4, 6

    key = jax.random.PRNGKey(0)
    k = jax.random.split(key, 10)

    # Inputs (edge_index / walks / deg built for API fidelity; stand-in ignores them)
    x = jax.random.normal(k[0], (num_nodes, in_dim), jnp.float32)
    src = jnp.arange(num_nodes, dtype=jnp.int32)
    dst = (src + 1) % num_nodes
    edge_index = jnp.concatenate(
        [jnp.stack([src, dst]), jnp.stack([dst, src])], axis=1)  # (2, 2N) unused
    walks = jax.random.randint(k[1], (num_nodes, num_walks, walks_length),
                               0, num_nodes, jnp.int32)
    deg = jnp.bincount(edge_index[1], length=num_nodes).astype(jnp.float32)

    # Deterministic parameters
    params = {
        # GraphTransformer stand-in (in_dim -> hidden_dim)
        "w_gt": glorot(k[2], in_dim, hidden_dim),
        "b_gt": jnp.zeros((hidden_dim,), jnp.float32),
        # lin1: hidden_dim -> 2*out_dim
        "w1": glorot(k[3], hidden_dim, 2 * out_dim),
        "b1": 0.1 * jax.random.normal(k[4], (2 * out_dim,), jnp.float32),
        # lin2: 2*out_dim -> out_dim
        "w2": glorot(k[5], 2 * out_dim, out_dim),
        "b2": 0.1 * jax.random.normal(k[6], (out_dim,), jnp.float32),
    }

    out = dbpmlp_forward(x, walks, deg, params, out_dim=out_dim)
    out = jax.block_until_ready(out)

    assert out.shape == (num_nodes, out_dim)
    # Exact softmax normalization -> rows sum to 1.
    assert bool(jnp.allclose(jnp.sum(out, axis=-1), 1.0, atol=1e-3))

    # Reference evaluated on the same bf16-rounded x / weights, f32 math.
    q = lambda a: a.astype(jnp.bfloat16).astype(jnp.float32)
    params_q = dict(params)
    for name in ("w_gt", "w1", "w2"):
        params_q[name] = q(params[name])
    with jax.default_matmul_precision("highest"):
        ref = dbpmlp_reference(q(x), params_q)
    assert bool(jnp.allclose(out, ref, rtol=5e-3, atol=5e-3))

    print("KERNEL_OK")
</pallas_src>

<mosaic_0001>
module attributes {stable_mosaic.version = 11 : i64} {
  func.func @dbpmlp_fused_kernel(%arg0: i32, %arg1: memref<128x16xbf16, #tpu.memory_space<vmem>>, %arg2: memref<16x32xbf16, #tpu.memory_space<vmem>>, %arg3: memref<1x32xf32, #tpu.memory_space<vmem>>, %arg4: memref<32x8xbf16, #tpu.memory_space<vmem>>, %arg5: memref<1x8xf32, #tpu.memory_space<vmem>>, %arg6: memref<8x4xbf16, #tpu.memory_space<vmem>>, %arg7: memref<1x4xf32, #tpu.memory_space<vmem>>, %arg8: memref<128x4xf32, #tpu.memory_space<vmem>>) attributes {dimension_semantics = [#tpu.dimension_semantics<parallel>], iteration_bounds = array<i64: 2>, scalar_prefetch = 0 : i64, scratch_operands = 0 : i64, tpu.core_type = #tpu.core_type<tc>, window_params = [{transform_indices = @transform_0, window_bounds = array<i64: 128, 16>}, {pipeline_mode = #tpu.pipeline_mode<synchronous>, transform_indices = @transform_1, window_bounds = array<i64: 16, 32>}, {pipeline_mode = #tpu.pipeline_mode<synchronous>, transform_indices = @transform_2, window_bounds = array<i64: 1, 32>}, {pipeline_mode = #tpu.pipeline_mode<synchronous>, transform_indices = @transform_3, window_bounds = array<i64: 32, 8>}, {pipeline_mode = #tpu.pipeline_mode<synchronous>, transform_indices = @transform_4, window_bounds = array<i64: 1, 8>}, {pipeline_mode = #tpu.pipeline_mode<synchronous>, transform_indices = @transform_5, window_bounds = array<i64: 8, 4>}, {pipeline_mode = #tpu.pipeline_mode<synchronous>, transform_indices = @transform_6, window_bounds = array<i64: 1, 4>}, {transform_indices = @transform_7, window_bounds = array<i64: 128, 4>}]} {
    %c0 = arith.constant 0 : index
    %c0_0 = arith.constant 0 : index
    %0 = vector.load %arg1[%c0, %c0_0] : memref<128x16xbf16, #tpu.memory_space<vmem>>, vector<128x16xbf16>
    %c0_1 = arith.constant 0 : index
    %c0_2 = arith.constant 0 : index
    %1 = vector.load %arg2[%c0_1, %c0_2] : memref<16x32xbf16, #tpu.memory_space<vmem>>, vector<16x32xbf16>
    %cst = arith.constant dense<0.000000e+00> : vector<128x32xf32>
    %2 = tpu.matmul %0, %1, %cst {dimension_numbers = #tpu.dot_dimension_numbers<[1], [0], [0], [1], [0, 0, 1, 1], [], []>} : vector<128x16xbf16>, vector<16x32xbf16>, vector<128x32xf32> -> vector<128x32xf32>
    %c0_3 = arith.constant 0 : index
    %c0_4 = arith.constant 0 : index
    %3 = vector.load %arg3[%c0_3, %c0_4] : memref<1x32xf32, #tpu.memory_space<vmem>>, vector<1x32xf32>
    %4 = vector.broadcast %3 : vector<1x32xf32> to vector<128x32xf32>
    %5 = arith.addf %2, %4 : vector<128x32xf32>
    %cst_5 = arith.constant 0.000000e+00 : f32
    %6 = vector.broadcast %cst_5 : f32 to vector<128x32xf32>
    %7 = arith.maximumf %5, %6 : vector<128x32xf32>
    %c0_6 = arith.constant 0 : index
    %c0_7 = arith.constant 0 : index
    %8 = vector.load %arg4[%c0_6, %c0_7] : memref<32x8xbf16, #tpu.memory_space<vmem>>, vector<32x8xbf16>
    %9 = arith.extf %8 : vector<32x8xbf16> to vector<32x8xf32>
    %cst_8 = arith.constant dense<0.000000e+00> : vector<128x8xf32>
    %10 = tpu.matmul %7, %9, %cst_8 {dimension_numbers = #tpu.dot_dimension_numbers<[1], [0], [0], [1], [0, 0, 1, 1], [], []>} : vector<128x32xf32>, vector<32x8xf32>, vector<128x8xf32> -> vector<128x8xf32>
    %c0_9 = arith.constant 0 : index
    %c0_10 = arith.constant 0 : index
    %11 = vector.load %arg5[%c0_9, %c0_10] : memref<1x8xf32, #tpu.memory_space<vmem>>, vector<1x8xf32>
    %12 = vector.broadcast %11 : vector<1x8xf32> to vector<128x8xf32>
    %13 = arith.addf %10, %12 : vector<128x8xf32>
    %cst_11 = arith.constant 0.000000e+00 : f32
    %14 = vector.broadcast %cst_11 : f32 to vector<128x8xf32>
    %15 = arith.maximumf %13, %14 : vector<128x8xf32>
    %c0_12 = arith.constant 0 : index
    %c0_13 = arith.constant 0 : index
    %16 = vector.load %arg6[%c0_12, %c0_13] : memref<8x4xbf16, #tpu.memory_space<vmem>>, vector<8x4xbf16>
    %17 = arith.extf %16 : vector<8x4xbf16> to vector<8x4xf32>
    %cst_14 = arith.constant dense<0.000000e+00> : vector<128x4xf32>
    %18 = tpu.matmul %15, %17, %cst_14 {dimension_numbers = #tpu.dot_dimension_numbers<[1], [0], [0], [1], [0, 0, 1, 1], [], []>} : vector<128x8xf32>, vector<8x4xf32>, vector<128x4xf32> -> vector<128x4xf32>
    %c0_15 = arith.constant 0 : index
    %c0_16 = arith.constant 0 : index
    %19 = vector.load %arg7[%c0_15, %c0_16] : memref<1x4xf32, #tpu.memory_space<vmem>>, vector<1x4xf32>
    %20 = vector.broadcast %19 : vector<1x4xf32> to vector<128x4xf32>
    %21 = arith.addf %18, %20 : vector<128x4xf32>
    %cst_17 = arith.constant dense<0xFF800000> : vector<128xf32>
    %22 = vector.multi_reduction <maximumf>, %21, %cst_17 [1] : vector<128x4xf32> to vector<128xf32>
    %23 = vector.shape_cast %22 : vector<128xf32> to vector<128x1xf32>
    %24 = vector.broadcast %23 : vector<128x1xf32> to vector<128x4xf32>
    %25 = arith.subf %21, %24 : vector<128x4xf32>
    %26 = math.exp %25 : vector<128x4xf32>
    %cst_18 = arith.constant dense<0.000000e+00> : vector<128xf32>
    %27 = vector.multi_reduction <add>, %26, %cst_18 [1] : vector<128x4xf32> to vector<128xf32>
    %28 = vector.shape_cast %27 : vector<128xf32> to vector<128x1xf32>
    %29 = vector.broadcast %28 : vector<128x1xf32> to vector<128x4xf32>
    %30 = arith.divf %26, %29 : vector<128x4xf32>
    %c0_19 = arith.constant 0 : index
    %c0_20 = arith.constant 0 : index
    %31 = vector.load %arg8[%c0_19, %c0_20] : memref<128x4xf32, #tpu.memory_space<vmem>>, vector<128x4xf32>
    tpu.vector_store %arg8[%c0_19, %c0_20], %30 {strides = array<i32>} : memref<128x4xf32, #tpu.memory_space<vmem>>, vector<128x4xf32>,
    return
  }
  func.func @transform_0(%arg0: i32) -> (i32, i32) {
    %c0_i32 = arith.constant 0 : i32
    %c0_i32_0 = arith.constant 0 : i32
    return %arg0, %c0_i32 : i32, i32
  }
  func.func @transform_1(%arg0: i32) -> (i32, i32) {
    %c0_i32 = arith.constant 0 : i32
    %c0_i32_0 = arith.constant 0 : i32
    %c0_i32_1 = arith.constant 0 : i32
    return %c0_i32, %c0_i32_0 : i32, i32
  }
  func.func @transform_2(%arg0: i32) -> (i32, i32) {
    %c0_i32 = arith.constant 0 : i32
    %c0_i32_0 = arith.constant 0 : i32
    %c0_i32_1 = arith.constant 0 : i32
    return %c0_i32, %c0_i32_0 : i32, i32
  }
  func.func @transform_3(%arg0: i32) -> (i32, i32) {
    %c0_i32 = arith.constant 0 : i32
    %c0_i32_0 = arith.constant 0 : i32
    %c0_i32_1 = arith.constant 0 : i32
    return %c0_i32, %c0_i32_0 : i32, i32
  }
  func.func @transform_4(%arg0: i32) -> (i32, i32) {
    %c0_i32 = arith.constant 0 : i32
    %c0_i32_0 = arith.constant 0 : i32
    %c0_i32_1 = arith.constant 0 : i32
    return %c0_i32, %c0_i32_0 : i32, i32
  }
  func.func @transform_5(%arg0: i32) -> (i32, i32) {
    %c0_i32 = arith.constant 0 : i32
    %c0_i32_0 = arith.constant 0 : i32
    %c0_i32_1 = arith.constant 0 : i32
    return %c0_i32, %c0_i32_0 : i32, i32
  }
  func.func @transform_6(%arg0: i32) -> (i32, i32) {
    %c0_i32 = arith.constant 0 : i32
    %c0_i32_0 = arith.constant 0 : i32
    %c0_i32_1 = arith.constant 0 : i32
    return %c0_i32, %c0_i32_0 : i32, i32
  }
  func.func @transform_7(%arg0: i32) -> (i32, i32) {
    %c0_i32 = arith.constant 0 : i32
    %c0_i32_0 = arith.constant 0 : i32
    return %arg0, %c0_i32 : i32, i32
  }
}

</mosaic_0001>

<llo_original>
// kernel: tpu_custom_call.1
$region0: #{tpu_custom_call.1}
  #allocation0 [shape = 'u32[]', space=smem, size = 0x4, offset = 0x4, fixed_abs, tag = 'smem constant byte address 0x4 - core index']
  #allocation1 [shape = 'u32[72,128]{1,0:T(1,128)}', space=vmem, size = 0x9000, scoped, tag = 'internal scratch']
  %s0 = inlined_call_operand.vmem [shape: bf16[256,16], index: 0, kind: input, shape index: {}]
  %s1 = inlined_call_operand.vmem [shape: bf16[16,32], index: 1, kind: input, shape index: {}]
  %s2 = inlined_call_operand.vmem [shape: f32[1,32], index: 2, kind: input, shape index: {}]
  %s3 = inlined_call_operand.vmem [shape: bf16[32,8], index: 3, kind: input, shape index: {}]
  %s4 = inlined_call_operand.vmem [shape: f32[1,8], index: 4, kind: input, shape index: {}]
  %s5 = inlined_call_operand.vmem [shape: bf16[8,4], index: 5, kind: input, shape index: {}]
  %s6 = inlined_call_operand.vmem [shape: f32[1,4], index: 6, kind: input, shape index: {}]
  %s7 = inlined_call_operand.vmem [shape: f32[256,4], index: 7, kind: output, shape index: {}]
  %s8 = sld [smem:[#allocation0]]
  $region61: #{tpu_custom_call.1} parent=0
    _
  %s10 = ssub.s32 1, %s8
  %s11 = scalar_select 0, %s10, %s8
  loop: start=0, step=1, limit=4
  $region2: #{tpu_custom_call.1} parent=0 // loop_pre_header
    _
  $region3: #{tpu_custom_call.1} parent=0 // loop_header
    %s13 = sphi 0, %s17
    %p14 = scmp.ge.s32.totalorder %s13, 4
    %s23 = sphi 0, %s25
    %s26 = sphi 0, %s23
    %s27 = sphi 0, %s26
    %s43 = sphi 0, %s27
    %s47 = sphi 0, %s47
    %s49 = sphi 0, %s47
    %s50 = sphi 0, %s49
    %s64 = sphi 0, %s50
    %s68 = sphi 0, %s68
    %s70 = sphi 0, %s68
    %s71 = sphi 0, %s70
    %s85 = sphi 0, %s71
    %s89 = sphi 0, %s89
    %s91 = sphi 0, %s89
    %s92 = sphi 0, %s91
    %s106 = sphi 0, %s92
    %s110 = sphi 0, %s110
    %s112 = sphi 0, %s110
    %s113 = sphi 0, %s112
    %s127 = sphi 0, %s113
    %s131 = sphi 0, %s131
    %s133 = sphi 0, %s131
    %s134 = sphi 0, %s133
    %s148 = sphi 0, %s134
    %s152 = sphi 0, %s152
    %s154 = sphi 0, %s152
    %s155 = sphi 0, %s154
    %s169 = sphi 0, %s155
    %s175 = sphi 0, %s177
    %s178 = sphi 0, %s175
    %s179 = sphi 0, %s178
    %s195 = sphi 0, %s179
  $region4: #{tpu_custom_call.1} parent=0 // loop_header_branch
    %16 = sbr.rel (%p14) target = $region8
  $region5: #{tpu_custom_call.1} parent=0 // loop_body
    %s18 = ssub.s32 %s13, 1
    %s19 = ssub.s32 %s13, 2
    %s20 = sadd.s32 %s13, 1
    %s21 = ssub.s32 %s13, %s20
    %p22 = scmp.eq.s32.totalorder %s21, 0
    %s24 = sadd.s32 %s23, 1
    %s25 = scalar_select %p22, %s23, %s24
    %p28 = pneg %p22
    %p29 = scmp.eq.s32.totalorder %s13, 1
    %p30 = por %p28, %p29
    %p31 = scmp.ne.s32.totalorder %s23, %s26
    %p32 = scmp.eq.s32.totalorder %s13, 0
    %p33 = por %p31, %p32
    %p34 = scmp.ne.s32.totalorder %s23, %s26
    %p35 = scmp.eq.s32.totalorder %s18, 1
    %p36 = por %p34, %p35
    %p37 = scmp.ne.s32.totalorder %s26, %s27
    %p38 = scmp.eq.s32.totalorder %s18, 0
    %p39 = por %p37, %p38
    %p40 = scmp.ne.s32.totalorder %s26, %s27
    %p41 = scmp.eq.s32.totalorder %s19, 1
    %p42 = por %p40, %p41
    %p44 = scmp.ne.s32.totalorder %s27, %s43
    %p45 = scmp.eq.s32.totalorder %s19, 0
    %p46 = por %p44, %p45
    %s48 = sadd.s32 %s47, 1
    %p51 = scmp.eq.s32.totalorder %s13, 1
    %p52 = scmp.ne.s32.totalorder %s47, %s49
    %p53 = scmp.eq.s32.totalorder %s13, 0
    %p54 = por %p52, %p53
    %p55 = scmp.ne.s32.totalorder %s47, %s49
    %p56 = scmp.eq.s32.totalorder %s18, 1
    %p57 = por %p55, %p56
    %p58 = scmp.ne.s32.totalorder %s49, %s50
    %p59 = scmp.eq.s32.totalorder %s18, 0
    %p60 = por %p58, %p59
    %p61 = scmp.ne.s32.totalorder %s49, %s50
    %p62 = scmp.eq.s32.totalorder %s19, 1
    %p63 = por %p61, %p62
    %p65 = scmp.ne.s32.totalorder %s50, %s64
    %p66 = scmp.eq.s32.totalorder %s19, 0
    %p67 = por %p65, %p66
    %s69 = sadd.s32 %s68, 1
    %p72 = scmp.eq.s32.totalorder %s13, 1
    %p73 = scmp.ne.s32.totalorder %s68, %s70
    %p74 = scmp.eq.s32.totalorder %s13, 0
    %p75 = por %p73, %p74
    %p76 = scmp.ne.s32.totalorder %s68, %s70
    %p77 = scmp.eq.s32.totalorder %s18, 1
    %p78 = por %p76, %p77
    %p79 = scmp.ne.s32.totalorder %s70, %s71
    %p80 = scmp.eq.s32.totalorder %s18, 0
    %p81 = por %p79, %p80
    %p82 = scmp.ne.s32.totalorder %s70, %s71
    %p83 = scmp.eq.s32.totalorder %s19, 1
    %p84 = por %p82, %p83
    %p86 = scmp.ne.s32.totalorder %s71, %s85
    %p87 = scmp.eq.s32.totalorder %s19, 0
    %p88 = por %p86, %p87
    %s90 = sadd.s32 %s89, 1
    %p93 = scmp.eq.s32.totalorder %s13, 1
    %p94 = scmp.ne.s32.totalorder %s89, %s91
    %p95 = scmp.eq.s32.totalorder %s13, 0
    %p96 = por %p94, %p95
    %p97 = scmp.ne.s32.totalorder %s89, %s91
    %p98 = scmp.eq.s32.totalorder %s18, 1
    %p99 = por %p97, %p98
    %p100 = scmp.ne.s32.totalorder %s91, %s92
    %p101 = scmp.eq.s32.totalorder %s18, 0
    %p102 = por %p100, %p101
    %p103 = scmp.ne.s32.totalorder %s91, %s92
    %p104 = scmp.eq.s32.totalorder %s19, 1
    %p105 = por %p103, %p104
    %p107 = scmp.ne.s32.totalorder %s92, %s106
    %p108 = scmp.eq.s32.totalorder %s19, 0
    %p109 = por %p107, %p108
    %s111 = sadd.s32 %s110, 1
    %p114 = scmp.eq.s32.totalorder %s13, 1
    %p115 = scmp.ne.s32.totalorder %s110, %s112
    %p116 = scmp.eq.s32.totalorder %s13, 0
    %p117 = por %p115, %p116
    %p118 = scmp.ne.s32.totalorder %s110, %s112
    %p119 = scmp.eq.s32.totalorder %s18, 1
    %p120 = por %p118, %p119
    %p121 = scmp.ne.s32.totalorder %s112, %s113
    %p122 = scmp.eq.s32.totalorder %s18, 0
    %p123 = por %p121, %p122
    %p124 = scmp.ne.s32.totalorder %s112, %s113
    %p125 = scmp.eq.s32.totalorder %s19, 1
    %p126 = por %p124, %p125
    %p128 = scmp.ne.s32.totalorder %s113, %s127
    %p129 = scmp.eq.s32.totalorder %s19, 0
    %p130 = por %p128, %p129
    %s132 = sadd.s32 %s131, 1
    %p135 = scmp.eq.s32.totalorder %s13, 1
    %p136 = scmp.ne.s32.totalorder %s131, %s133
    %p137 = scmp.eq.s32.totalorder %s13, 0
    %p138 = por %p136, %p137
    %p139 = scmp.ne.s32.totalorder %s131, %s133
    %p140 = scmp.eq.s32.totalorder %s18, 1
    %p141 = por %p139, %p140
    %p142 = scmp.ne.s32.totalorder %s133, %s134
    %p143 = scmp.eq.s32.totalorder %s18, 0
    %p144 = por %p142, %p143
    %p145 = scmp.ne.s32.totalorder %s133, %s134
    %p146 = scmp.eq.s32.totalorder %s19, 1
    %p147 = por %p145, %p146
    %p149 = scmp.ne.s32.totalorder %s134, %s148
    %p150 = scmp.eq.s32.totalorder %s19, 0
    %p151 = por %p149, %p150
    %s153 = sadd.s32 %s152, 1
    %p156 = scmp.eq.s32.totalorder %s13, 1
    %p157 = scmp.ne.s32.totalorder %s152, %s154
    %p158 = scmp.eq.s32.totalorder %s13, 0
    %p159 = por %p157, %p158
    %p160 = scmp.ne.s32.totalorder %s152, %s154
    %p161 = scmp.eq.s32.totalorder %s18, 1
    %p162 = por %p160, %p161
    %p163 = scmp.ne.s32.totalorder %s154, %s155
    %p164 = scmp.eq.s32.totalorder %s18, 0
    %p165 = por %p163, %p164
    %p166 = scmp.ne.s32.totalorder %s154, %s155
    %p167 = scmp.eq.s32.totalorder %s19, 1
    %p168 = por %p166, %p167
    %p170 = scmp.ne.s32.totalorder %s155, %s169
    %p171 = scmp.eq.s32.totalorder %s19, 0
    %p172 = por %p170, %p171
    %s173 = ssub.s32 %s13, %s20
    %p174 = scmp.eq.s32.totalorder %s173, 0
    %s176 = sadd.s32 %s175, 1
    %s177 = scalar_select %p174, %s175, %s176
    %p180 = pneg %p174
    %p181 = scmp.eq.s32.totalorder %s13, 1
    %p182 = por %p180, %p181
    %p183 = scmp.ne.s32.totalorder %s175, %s178
    %p184 = scmp.eq.s32.totalorder %s13, 0
    %p185 = por %p183, %p184
    %p186 = scmp.ne.s32.totalorder %s175, %s178
    %p187 = scmp.eq.s32.totalorder %s18, 1
    %p188 = por %p186, %p187
    %p189 = scmp.ne.s32.totalorder %s178, %s179
    %p190 = scmp.eq.s32.totalorder %s18, 0
    %p191 = por %p189, %p190
    %p192 = scmp.ne.s32.totalorder %s178, %s179
    %p193 = scmp.eq.s32.totalorder %s19, 1
    %p194 = por %p192, %p193
    %p196 = scmp.ne.s32.totalorder %s179, %s195
    %p197 = scmp.eq.s32.totalorder %s19, 0
    %p198 = por %p196, %p197
    %p199 = scmp.le.s32.totalorder 1, %s13
    %p200 = scmp.lt.s32.totalorder %s13, 3
    %p201 = pnand %p199, %p200
    %p202 = pneg %p201
    // Predicated region
    $region9: #{tpu_custom_call.1} parent=5 // pred_check
      _
    $region10: #{tpu_custom_call.1} parent=5 // pred_check_branch
      %204 = sbr.rel (%p201) target = $region12
    $region11: #{tpu_custom_call.1} parent=5 // pred_region
      %s205 = ssub.s32 %s13, 1
      // Predicated region
      $region13: #{tpu_custom_call.1} parent=11 // pred_check
        %p206 = pneg %p60
      $region14: #{tpu_custom_call.1} parent=11 // pred_check_branch
        %208 = sbr.rel (%p206) target = $region16
      $region15: #{tpu_custom_call.1} parent=11 // pred_region
        _
      $region16: #{tpu_custom_call.1} parent=11 // pred_fallthru
        _
      // Predicated region
      $region17: #{tpu_custom_call.1} parent=11 // pred_check
        %p209 = pneg %p81
      $region18: #{tpu_custom_call.1} parent=11 // pred_check_branch
        %211 = sbr.rel (%p209) target = $region20
      $region19: #{tpu_custom_call.1} parent=11 // pred_region
        _
      $region20: #{tpu_custom_call.1} parent=11 // pred_fallthru
        _
      // Predicated region
      $region21: #{tpu_custom_call.1} parent=11 // pred_check
        %p212 = pneg %p102
      $region22: #{tpu_custom_call.1} parent=11 // pred_check_branch
        %214 = sbr.rel (%p212) target = $region24
      $region23: #{tpu_custom_call.1} parent=11 // pred_region
        _
      $region24: #{tpu_custom_call.1} parent=11 // pred_fallthru
        _
      // Predicated region
      $region25: #{tpu_custom_call.1} parent=11 // pred_check
        %p215 = pneg %p123
      $region26: #{tpu_custom_call.1} parent=11 // pred_check_branch
        %217 = sbr.rel (%p215) target = $region28
      $region27: #{tpu_custom_call.1} parent=11 // pred_region
        _
      $region28: #{tpu_custom_call.1} parent=11 // pred_fallthru
        _
      // Predicated region
      $region29: #{tpu_custom_call.1} parent=11 // pred_check
        %p218 = pneg %p144
      $region30: #{tpu_custom_call.1} parent=11 // pred_check_branch
        %220 = sbr.rel (%p218) target = $region32
      $region31: #{tpu_custom_call.1} parent=11 // pred_region
        _
      $region32: #{tpu_custom_call.1} parent=11 // pred_fallthru
        _
      // Predicated region
      $region33: #{tpu_custom_call.1} parent=11 // pred_check
        %p221 = pneg %p165
      $region34: #{tpu_custom_call.1} parent=11 // pred_check_branch
        %223 = sbr.rel (%p221) target = $region36
      $region35: #{tpu_custom_call.1} parent=11 // pred_region
        _
      $region36: #{tpu_custom_call.1} parent=11 // pred_fallthru
        _
    $region12: #{tpu_custom_call.1} parent=5 // pred_fallthru
      _
    %p224 = scmp.lt.s32.totalorder %s13, 2
    // Predicated region
    $region37: #{tpu_custom_call.1} parent=5 // pred_check
      %p225 = pneg %p224
    $region38: #{tpu_custom_call.1} parent=5 // pred_check_branch
      %227 = sbr.rel (%p225) target = $region40
    $region39: #{tpu_custom_call.1} parent=5 // pred_region
      // Predicated region
      $region41: #{tpu_custom_call.1} parent=39 // pred_check
        %p228 = pneg %p33
      $region42: #{tpu_custom_call.1} parent=39 // pred_check_branch
        %230 = sbr.rel (%p228) target = $region44
      $region43: #{tpu_custom_call.1} parent=39 // pred_region
        %s231 = smul.u32 16, %s13
        %p232 = scmp.lt.s32.totalorder %s231, 31
        %s233 = scalar_select %p232, %s231, 31
        %s234 = smul.addr %s233, 4
        %s235 = scalar_lea.vmem %s0, %s234
        %s236 = smul.u32 16, %s13
      $region44: #{tpu_custom_call.1} parent=39 // pred_fallthru
        _
    $region40: #{tpu_custom_call.1} parent=5 // pred_fallthru
      _
    %p237 = scmp.le.s32.totalorder 1, %s13
    %p238 = scmp.lt.s32.totalorder %s13, 3
    %p239 = pnand %p237, %p238
    %p240 = pneg %p239
    // Predicated region
    $region45: #{tpu_custom_call.1} parent=5 // pred_check
      _
    $region46: #{tpu_custom_call.1} parent=5 // pred_check_branch
      %242 = sbr.rel (%p239) target = $region48
    $region47: #{tpu_custom_call.1} parent=5 // pred_region
      %s243 = ssub.s32 %s13, 1
      %s244 = smul.u32 16, %s18
      %p245 = scmp.lt.s32.totalorder %s244, 31
      %s246 = scalar_select %p245, %s244, 31
      %s247 = smul.addr %s246, 4
      %s248 = scalar_lea.vmem %s0, %s247
      %p249 = pneg %p39
      %p250 = pneg %p36
      %p251 = pneg %p60
      %p252 = pneg %p57
      %p253 = pneg %p81
      %p254 = pneg %p78
      %p255 = pneg %p102
      %p256 = pneg %p99
      %p257 = pneg %p123
      %p258 = pneg %p120
      %p259 = pneg %p144
      %p260 = pneg %p141
      %p261 = pneg %p165
      %p262 = pneg %p162
      %p263 = pneg %p191
      %p264 = pneg %p188
      %s265 = smul.u32 16, %s18
      %p266 = scmp.lt.s32.totalorder %s265, 31
      %s267 = scalar_select %p266, %s265, 31
      %s268 = smul.addr %s267, 8
      %s269 = scalar_lea.vmem %s7, %s268
      %s270 = smul.u32 16, %s18
      %p271 = scmp.lt.s32.totalorder %s270, 31
      %s272 = scalar_select %p271, %s270, 31
      %s273 = smul.addr %s272, 4
      %s274 = scalar_lea.vmem %s0, %s273
      %s275 = smul.u32 16, %s18
      %s276 = smul.u32 16, %s18
      %p277 = scmp.lt.s32.totalorder %s276, 31
      %s278 = scalar_select %p277, %s276, 31
      %s279 = smul.addr %s278, 8
      %s280 = scalar_lea.vmem %s7, %s279
      %s281 = smul.u32 16, %s18
      %v283 = vld [vmem:[%s274] sm:$0xf]
      %v284 = vld [vmem:[%s274 + $0x4] sm:$0xf]
      %v285 = vld [vmem:[%s274 + $0x8] sm:$0xf]
      %v286 = vld [vmem:[%s274 + $0xc] sm:$0xf]
      %v287 = vld [vmem:[%s274 + $0x10] sm:$0xf]
      %v288 = vld [vmem:[%s274 + $0x14] sm:$0xf]
      %v289 = vld [vmem:[%s274 + $0x18] sm:$0xf]
      %v290 = vld [vmem:[%s274 + $0x1c] sm:$0xf]
      %v291 = vld [vmem:[%s274 + $0x20] sm:$0xf]
      %v292 = vld [vmem:[%s274 + $0x24] sm:$0xf]
      %v293 = vld [vmem:[%s274 + $0x28] sm:$0xf]
      %v294 = vld [vmem:[%s274 + $0x2c] sm:$0xf]
      %v295 = vld [vmem:[%s274 + $0x30] sm:$0xf]
      %v296 = vld [vmem:[%s274 + $0x34] sm:$0xf]
      %v297 = vld [vmem:[%s274 + $0x38] sm:$0xf]
      %v298 = vld [vmem:[%s274 + $0x3c] sm:$0xf]
      %v299 = vld [vmem:[%s1] sm:$0xf]
      %v300 = vld [vmem:[%s1 + $0x4] sm:$0xf]
      %v301 = vld [vmem:[%s2] sm:$0x1]
      %v303 = vperm.slane %v301, 0
      %v321 = vunpack.c.l.b16 %v283
      %v322 = vunpack.c.l.b16 %v284
      %v323 = vunpack.c.l.b16 %v285
      %v324 = vunpack.c.l.b16 %v286
      %v325 = vunpack.c.l.b16 %v287
      %v326 = vunpack.c.l.b16 %v288
      %v327 = vunpack.c.l.b16 %v289
      %v328 = vunpack.c.l.b16 %v290
      %v329 = vunpack.c.l.b16 %v291
      %v330 = vunpack.c.l.b16 %v292
      %v331 = vunpack.c.l.b16 %v293
      %v332 = vunpack.c.l.b16 %v294
      %v333 = vunpack.c.l.b16 %v295
      %v334 = vunpack.c.l.b16 %v296
      %v335 = vunpack.c.l.b16 %v297
      %v336 = vunpack.c.l.b16 %v298
      %v337 = vpack.c.b16 %v322, %v321
      %v338 = vpack.c.b16 %v324, %v323
      %v339 = vpack.c.b16 %v326, %v325
      %v340 = vpack.c.b16 %v328, %v327
      %v341 = vpack.c.b16 %v330, %v329
      %v342 = vpack.c.b16 %v332, %v331
      %v343 = vpack.c.b16 %v334, %v333
      %v344 = vpack.c.b16 %v336, %v335
      %v347 = vunpack.c.l.b16 %v299
      %v348 = vunpack.c.l.b16 %v300
      %v349 = vpack.c.b16 %v348, %v347
      %vm351 = vcmask 130048
      %v353 = vsel %vm351, %v337, 0
      %v356 = vsel %vm351, %v338, 0
      %v359 = vsel %vm351, %v339, 0
      %v362 = vsel %vm351, %v340, 0
      %v365 = vsel %vm351, %v341, 0
      %v368 = vsel %vm351, %v342, 0
      %v371 = vsel %vm351, %v343, 0
      %v374 = vsel %vm351, %v344, 0
      %376 = vmatpush.bf16.msra.mxu0 0
      %377 = vmatpush.bf16.msra.mxu0 0
      %378 = vmatpush.bf16.msra.mxu0 0
      %379 = vmatpush.bf16.msra.mxu0 0
      %380 = vmatpush.bf16.msra.mxu0 0
      %381 = vmatpush.bf16.msra.mxu0 0
      %382 = vmatpush.bf16.msra.mxu0 0
      %383 = vmatpush.bf16.msra.mxu0 %v349
      %384 = vmatmul.bf16.gmra.mxu0 %v353
      %v385 = vpop.f32.mrf.mxu0
      %v386 = vadd.f32 %v303, %v385
      %v387 = vpop.f32.mrf.mxu0
      %v388 = vadd.f32 %v303, %v387
      %389 = vmatmul.bf16.gmra.mxu0 %v356
      %v390 = vpop.f32.mrf.mxu0
      %v391 = vadd.f32 %v303, %v390
      %v392 = vpop.f32.mrf.mxu0
      %v393 = vadd.f32 %v303, %v392
      %394 = vmatmul.bf16.gmra.mxu0 %v359
      %v395 = vpop.f32.mrf.mxu0
      %v396 = vadd.f32 %v303, %v395
      %v397 = vpop.f32.mrf.mxu0
      %v398 = vadd.f32 %v303, %v397
      %399 = vmatmul.bf16.gmra.mxu0 %v362
      %v400 = vpop.f32.mrf.mxu0
      %v401 = vadd.f32 %v303, %v400
      %v402 = vpop.f32.mrf.mxu0
      %v403 = vadd.f32 %v303, %v402
      %404 = vmatmul.bf16.gmra.mxu0 %v365
      %v405 = vpop.f32.mrf.mxu0
      %v406 = vadd.f32 %v303, %v405
      %v407 = vpop.f32.mrf.mxu0
      %v408 = vadd.f32 %v303, %v407
      %409 = vmatmul.bf16.gmra.mxu0 %v368
      %v410 = vpop.f32.mrf.mxu0
      %v411 = vadd.f32 %v303, %v410
      %v412 = vpop.f32.mrf.mxu0
      %v413 = vadd.f32 %v303, %v412
      %414 = vmatmul.bf16.gmra.mxu0 %v371
      %v415 = vpop.f32.mrf.mxu0
      %v416 = vadd.f32 %v303, %v415
      %v417 = vpop.f32.mrf.mxu0
      %v418 = vadd.f32 %v303, %v417
      %419 = vmatmul.bf16.gmra.mxu0 %v374
      %v420 = vpop.f32.mrf.mxu0
      %v421 = vadd.f32 %v303, %v420
      %v422 = vpop.f32.mrf.mxu0
      %v423 = vadd.f32 %v303, %v422
      %424 = vdwg.mxu0
      %v425 = vmax.f32 %v386, 0.0
      %v426 = vmax.f32 %v388, 0.0
      %v427 = vmax.f32 %v391, 0.0
      %v428 = vmax.f32 %v393, 0.0
      %v429 = vmax.f32 %v396, 0.0
      %v430 = vmax.f32 %v398, 0.0
      %v431 = vmax.f32 %v401, 0.0
      %v432 = vmax.f32 %v403, 0.0
      %v433 = vmax.f32 %v406, 0.0
      %v434 = vmax.f32 %v408, 0.0
      %v435 = vmax.f32 %v411, 0.0
      %v436 = vmax.f32 %v413, 0.0
      %v437 = vmax.f32 %v416, 0.0
      %v438 = vmax.f32 %v418, 0.0
      %v439 = vmax.f32 %v421, 0.0
      %v440 = vmax.f32 %v423, 0.0
      %v441 = vld [vmem:[%s3] sm:$0xf]
      %v442 = vld [vmem:[%s3 + $0x4] sm:$0xf]
      %v443 = vld [vmem:[%s3 + $0x8] sm:$0xf]
      %v444 = vld [vmem:[%s3 + $0xc] sm:$0xf]
      %v445 = vunpack.c.l.bf16 %v441
      %v446 = vunpack.c.l.bf16 %v442
      %v447 = vunpack.c.l.bf16 %v443
      %v448 = vunpack.c.l.bf16 %v444
      %v449 = vld [vmem:[%s4] sm:$0x1]
      %v451 = vperm.slane %v449, 0
      %vm453 = vcmask 261120
      %v455 = vsel %vm453, %v425, 0
      %v458 = vsel %vm453, %v426, 0
      %v461 = vsel %vm453, %v427, 0
      %v464 = vsel %vm453, %v428, 0
      %v467 = vsel %vm453, %v429, 0
      %v470 = vsel %vm453, %v430, 0
      %v473 = vsel %vm453, %v431, 0
      %v476 = vsel %vm453, %v432, 0
      %v479 = vsel %vm453, %v433, 0
      %v482 = vsel %vm453, %v434, 0
      %v485 = vsel %vm453, %v435, 0
      %v488 = vsel %vm453, %v436, 0
      %v491 = vsel %vm453, %v437, 0
      %v494 = vsel %vm453, %v438, 0
      %v497 = vsel %vm453, %v439, 0
      %v500 = vsel %vm453, %v440, 0
      %502 = vmatpush.msra.mxu0 0.0
      %503 = vmatpush.msra.mxu0 0.0
      %504 = vmatpush.msra.mxu0 0.0
      %505 = vmatpush.msra.mxu0 0.0
      %506 = vmatpush.msra.mxu0 0.0
      %507 = vmatpush.msra.mxu0 0.0
      %508 = vmatpush.msra.mxu0 0.0
      %509 = vmatpush.msra.mxu0 0.0
      %510 = vmatpush.msra.mxu0 0.0
      %511 = vmatpush.msra.mxu0 0.0
      %512 = vmatpush.msra.mxu0 0.0
      %513 = vmatpush.msra.mxu0 0.0
      %514 = vmatpush.msra.mxu0 %v448
      %515 = vmatpush.msra.mxu0 %v447
      %516 = vmatpush.msra.mxu0 %v446
      %517 = vmatpush.msra.mxu0 %v445
      %518 = vmatmul.f32.gmra.mxu0 %v455
      %v519 = vpop.f32.mrf.mxu0
      %v520 = vadd.f32 %v451, %v519
      %521 = vmatmul.f32.gmra.mxu0 %v458
      %v522 = vpop.f32.mrf.mxu0
      %v523 = vadd.f32 %v451, %v522
      %524 = vmatmul.f32.gmra.mxu0 %v461
      %v525 = vpop.f32.mrf.mxu0
      %v526 = vadd.f32 %v451, %v525
      %527 = vmatmul.f32.gmra.mxu0 %v464
      %v528 = vpop.f32.mrf.mxu0
      %v529 = vadd.f32 %v451, %v528
      %530 = vmatmul.f32.gmra.mxu0 %v467
      %v531 = vpop.f32.mrf.mxu0
      %v532 = vadd.f32 %v451, %v531
      %533 = vmatmul.f32.gmra.mxu0 %v470
      %v534 = vpop.f32.mrf.mxu0
      %v535 = vadd.f32 %v451, %v534
      %536 = vmatmul.f32.gmra.mxu0 %v473
      %v537 = vpop.f32.mrf.mxu0
      %v538 = vadd.f32 %v451, %v537
      %539 = vmatmul.f32.gmra.mxu0 %v476
      %v540 = vpop.f32.mrf.mxu0
      %v541 = vadd.f32 %v451, %v540
      %542 = vmatmul.f32.gmra.mxu0 %v479
      %v543 = vpop.f32.mrf.mxu0
      %v544 = vadd.f32 %v451, %v543
      %545 = vmatmul.f32.gmra.mxu0 %v482
      %v546 = vpop.f32.mrf.mxu0
      %v547 = vadd.f32 %v451, %v546
      %548 = vmatmul.f32.gmra.mxu0 %v485
      %v549 = vpop.f32.mrf.mxu0
      %v550 = vadd.f32 %v451, %v549
      %551 = vmatmul.f32.gmra.mxu0 %v488
      %v552 = vpop.f32.mrf.mxu0
      %v553 = vadd.f32 %v451, %v552
      %554 = vmatmul.f32.gmra.mxu0 %v491
      %v555 = vpop.f32.mrf.mxu0
      %v556 = vadd.f32 %v451, %v555
      %557 = vmatmul.f32.gmra.mxu0 %v494
      %v558 = vpop.f32.mrf.mxu0
      %v559 = vadd.f32 %v451, %v558
      %560 = vmatmul.f32.gmra.mxu0 %v497
      %v561 = vpop.f32.mrf.mxu0
      %v562 = vadd.f32 %v451, %v561
      %563 = vmatmul.f32.gmra.mxu0 %v500
      %v564 = vpop.f32.mrf.mxu0
      %v565 = vadd.f32 %v451, %v564
      %566 = vdwg.mxu0
      %v567 = vmax.f32 %v520, 0.0
      %v568 = vmax.f32 %v523, 0.0
      %v569 = vmax.f32 %v526, 0.0
      %v570 = vmax.f32 %v529, 0.0
      %v571 = vmax.f32 %v532, 0.0
      %v572 = vmax.f32 %v535, 0.0
      %v573 = vmax.f32 %v538, 0.0
      %v574 = vmax.f32 %v541, 0.0
      %v575 = vmax.f32 %v544, 0.0
      %v576 = vmax.f32 %v547, 0.0
      %v577 = vmax.f32 %v550, 0.0
      %v578 = vmax.f32 %v553, 0.0
      %v579 = vmax.f32 %v556, 0.0
      %v580 = vmax.f32 %v559, 0.0
      %v581 = vmax.f32 %v562, 0.0
      %v582 = vmax.f32 %v565, 0.0
      %v583 = vld [vmem:[%s5] sm:$0xf]
      %v584 = vunpack.c.l.bf16 %v583
      %v585 = vld [vmem:[%s6] sm:$0x1]
      %v587 = vperm.slane %v585, 0
      %vm589 = vcmask 64512
      %v591 = vsel %vm589, %v567, 0
      %v594 = vsel %vm589, %v568, 0
      %v597 = vsel %vm589, %v569, 0
      %v600 = vsel %vm589, %v570, 0
      %v603 = vsel %vm589, %v571, 0
      %v606 = vsel %vm589, %v572, 0
      %v609 = vsel %vm589, %v573, 0
      %v612 = vsel %vm589, %v574, 0
      %v615 = vsel %vm589, %v575, 0
      %v618 = vsel %vm589, %v576, 0
      %v621 = vsel %vm589, %v577, 0
      %v624 = vsel %vm589, %v578, 0
      %v627 = vsel %vm589, %v579, 0
      %v630 = vsel %vm589, %v580, 0
      %v633 = vsel %vm589, %v581, 0
      %v636 = vsel %vm589, %v582, 0
      %638 = vmatpush.msra.mxu0 0.0
      %639 = vmatpush.msra.mxu0 0.0
      %640 = vmatpush.msra.mxu0 0.0
      %641 = vmatpush.msra.mxu0 0.0
      %642 = vmatpush.msra.mxu0 0.0
      %643 = vmatpush.msra.mxu0 0.0
      %644 = vmatpush.msra.mxu0 0.0
      %645 = vmatpush.msra.mxu0 0.0
      %646 = vmatpush.msra.mxu0 0.0
      %647 = vmatpush.msra.mxu0 0.0
      %648 = vmatpush.msra.mxu0 0.0
      %649 = vmatpush.msra.mxu0 0.0
      %650 = vmatpush.msra.mxu0 0.0
      %651 = vmatpush.msra.mxu0 0.0
      %652 = vmatpush.msra.mxu0 0.0
      %653 = vmatpush.msra.mxu0 %v584
      %654 = vmatmul.f32.gmra.mxu0 %v591
      %v655 = vpop.f32.mrf.mxu0
      %v656 = vadd.f32 %v587, %v655
      %657 = vmatmul.f32.gmra.mxu0 %v594
      %v658 = vpop.f32.mrf.mxu0
      %v659 = vadd.f32 %v587, %v658
      %660 = vmatmul.f32.gmra.mxu0 %v597
      %v661 = vpop.f32.mrf.mxu0
      %v662 = vadd.f32 %v587, %v661
      %663 = vmatmul.f32.gmra.mxu0 %v600
      %v664 = vpop.f32.mrf.mxu0
      %v665 = vadd.f32 %v587, %v664
      %666 = vmatmul.f32.gmra.mxu0 %v603
      %v667 = vpop.f32.mrf.mxu0
      %v668 = vadd.f32 %v587, %v667
      %669 = vmatmul.f32.gmra.mxu0 %v606
      %v670 = vpop.f32.mrf.mxu0
      %v671 = vadd.f32 %v587, %v670
      %672 = vmatmul.f32.gmra.mxu0 %v609
      %v673 = vpop.f32.mrf.mxu0
      %v674 = vadd.f32 %v587, %v673
      %675 = vmatmul.f32.gmra.mxu0 %v612
      %v676 = vpop.f32.mrf.mxu0
      %v677 = vadd.f32 %v587, %v676
      %678 = vmatmul.f32.gmra.mxu0 %v615
      %v679 = vpop.f32.mrf.mxu0
      %v680 = vadd.f32 %v587, %v679
      %681 = vmatmul.f32.gmra.mxu0 %v618
      %v682 = vpop.f32.mrf.mxu0
      %v683 = vadd.f32 %v587, %v682
      %684 = vmatmul.f32.gmra.mxu0 %v621
      %v685 = vpop.f32.mrf.mxu0
      %v686 = vadd.f32 %v587, %v685
      %687 = vmatmul.f32.gmra.mxu0 %v624
      %v688 = vpop.f32.mrf.mxu0
      %v689 = vadd.f32 %v587, %v688
      %690 = vmatmul.f32.gmra.mxu0 %v627
      %v691 = vpop.f32.mrf.mxu0
      %v692 = vadd.f32 %v587, %v691
      %693 = vmatmul.f32.gmra.mxu0 %v630
      %v694 = vpop.f32.mrf.mxu0
      %v695 = vadd.f32 %v587, %v694
      %696 = vmatmul.f32.gmra.mxu0 %v633
      %v697 = vpop.f32.mrf.mxu0
      %v698 = vadd.f32 %v587, %v697
      %699 = vmatmul.f32.gmra.mxu0 %v636
      %v700 = vpop.f32.mrf.mxu0
      %v701 = vadd.f32 %v587, %v700
      %702 = vdwg.mxu0
      %vm703 = vcmask 31744
      %v704 = vsel %vm703, %v656, -inf
      %705 = vmax.xlane.f32.xlu0 %v704
      %v706 = vpop.xlane.xlu0 %705
      %v707 = vsel %vm703, %v659, -inf
      %708 = vmax.xlane.f32.xlu0 %v707
      %v709 = vpop.xlane.xlu0 %708
      %v710 = vsel %vm703, %v662, -inf
      %711 = vmax.xlane.f32.xlu0 %v710
      %v712 = vpop.xlane.xlu0 %711
      %v713 = vsel %vm703, %v665, -inf
      %714 = vmax.xlane.f32.xlu0 %v713
      %v715 = vpop.xlane.xlu0 %714
      %v716 = vsel %vm703, %v668, -inf
      %717 = vmax.xlane.f32.xlu0 %v716
      %v718 = vpop.xlane.xlu0 %717
      %v719 = vsel %vm703, %v671, -inf
      %720 = vmax.xlane.f32.xlu0 %v719
      %v721 = vpop.xlane.xlu0 %720
      %v722 = vsel %vm703, %v674, -inf
      %723 = vmax.xlane.f32.xlu0 %v722
      %v724 = vpop.xlane.xlu0 %723
      %v725 = vsel %vm703, %v677, -inf
      %726 = vmax.xlane.f32.xlu0 %v725
      %v727 = vpop.xlane.xlu0 %726
      %v728 = vsel %vm703, %v680, -inf
      %729 = vmax.xlane.f32.xlu0 %v728
      %v730 = vpop.xlane.xlu0 %729
      %v731 = vsel %vm703, %v683, -inf
      %732 = vmax.xlane.f32.xlu0 %v731
      %v733 = vpop.xlane.xlu0 %732
      %v734 = vsel %vm703, %v686, -inf
      %735 = vmax.xlane.f32.xlu0 %v734
      %v736 = vpop.xlane.xlu0 %735
      %v737 = vsel %vm703, %v689, -inf
      %738 = vmax.xlane.f32.xlu0 %v737
      %v739 = vpop.xlane.xlu0 %738
      %v740 = vsel %vm703, %v692, -inf
      %741 = vmax.xlane.f32.xlu0 %v740
      %v742 = vpop.xlane.xlu0 %741
      %v743 = vsel %vm703, %v695, -inf
      %744 = vmax.xlane.f32.xlu0 %v743
      %v745 = vpop.xlane.xlu0 %744
      %v746 = vsel %vm703, %v698, -inf
      %747 = vmax.xlane.f32.xlu0 %v746
      %v748 = vpop.xlane.xlu0 %747
      %v749 = vsel %vm703, %v701, -inf
      %750 = vmax.xlane.f32.xlu0 %v749
      %v751 = vpop.xlane.xlu0 %750
      %v752 = vsub.f32 %v656, %v706
      %v753 = vsub.f32 %v659, %v709
      %v754 = vsub.f32 %v662, %v712
      %v755 = vsub.f32 %v665, %v715
      %v756 = vsub.f32 %v668, %v718
      %v757 = vsub.f32 %v671, %v721
      %v758 = vsub.f32 %v674, %v724
      %v759 = vsub.f32 %v677, %v727
      %v760 = vsub.f32 %v680, %v730
      %v761 = vsub.f32 %v683, %v733
      %v762 = vsub.f32 %v686, %v736
      %v763 = vsub.f32 %v689, %v739
      %v764 = vsub.f32 %v692, %v742
      %v765 = vsub.f32 %v695, %v745
      %v766 = vsub.f32 %v698, %v748
      %v767 = vsub.f32 %v701, %v751
      %v768 = vmul.f32 %v752, 1.442695
      %v769 = vpow.pop %v768
      %v770 = vmul.f32 %v753, 1.442695
      %v771 = vpow.pop %v770
      %v772 = vmul.f32 %v754, 1.442695
      %v773 = vpow.pop %v772
      %v774 = vmul.f32 %v755, 1.442695
      %v775 = vpow.pop %v774
      %v776 = vmul.f32 %v756, 1.442695
      %v777 = vpow.pop %v776
      %v778 = vmul.f32 %v757, 1.442695
      %v779 = vpow.pop %v778
      %v780 = vmul.f32 %v758, 1.442695
      %v781 = vpow.pop %v780
      %v782 = vmul.f32 %v759, 1.442695
      %v783 = vpow.pop %v782
      %v784 = vmul.f32 %v760, 1.442695
      %v785 = vpow.pop %v784
      %v786 = vmul.f32 %v761, 1.442695
      %v787 = vpow.pop %v786
      %v788 = vmul.f32 %v762, 1.442695
      %v789 = vpow.pop %v788
      %v790 = vmul.f32 %v763, 1.442695
      %v791 = vpow.pop %v790
      %v792 = vmul.f32 %v764, 1.442695
      %v793 = vpow.pop %v792
      %v794 = vmul.f32 %v765, 1.442695
      %v795 = vpow.pop %v794
      %v796 = vmul.f32 %v766, 1.442695
      %v797 = vpow.pop %v796
      %v798 = vmul.f32 %v767, 1.442695
      %v799 = vpow.pop %v798
      %v800 = vsel %vm703, %v769, 0.0
      %801 = vadd.xlane.f32.xlu0 %v800
      %v802 = vpop.xlane.xlu0 %801
      %v803 = vsel %vm703, %v771, 0.0
      %804 = vadd.xlane.f32.xlu0 %v803
      %v805 = vpop.xlane.xlu0 %804
      %v806 = vsel %vm703, %v773, 0.0
      %807 = vadd.xlane.f32.xlu0 %v806
      %v808 = vpop.xlane.xlu0 %807
      %v809 = vsel %vm703, %v775, 0.0
      %810 = vadd.xlane.f32.xlu0 %v809
      %v811 = vpop.xlane.xlu0 %810
      %v812 = vsel %vm703, %v777, 0.0
      %813 = vadd.xlane.f32.xlu0 %v812
      %v814 = vpop.xlane.xlu0 %813
      %v815 = vsel %vm703, %v779, 0.0
      %816 = vadd.xlane.f32.xlu0 %v815
      %v817 = vpop.xlane.xlu0 %816
      %v818 = vsel %vm703, %v781, 0.0
      %819 = vadd.xlane.f32.xlu0 %v818
      %v820 = vpop.xlane.xlu0 %819
      %v821 = vsel %vm703, %v783, 0.0
      %822 = vadd.xlane.f32.xlu0 %v821
      %v823 = vpop.xlane.xlu0 %822
      %v824 = vsel %vm703, %v785, 0.0
      %825 = vadd.xlane.f32.xlu0 %v824
      %v826 = vpop.xlane.xlu0 %825
      %v827 = vsel %vm703, %v787, 0.0
      %828 = vadd.xlane.f32.xlu0 %v827
      %v829 = vpop.xlane.xlu0 %828
      %v830 = vsel %vm703, %v789, 0.0
      %831 = vadd.xlane.f32.xlu0 %v830
      %v832 = vpop.xlane.xlu0 %831
      %v833 = vsel %vm703, %v791, 0.0
      %834 = vadd.xlane.f32.xlu0 %v833
      %v835 = vpop.xlane.xlu0 %834
      %v836 = vsel %vm703, %v793, 0.0
      %837 = vadd.xlane.f32.xlu0 %v836
      %v838 = vpop.xlane.xlu0 %837
      %v839 = vsel %vm703, %v795, 0.0
      %840 = vadd.xlane.f32.xlu0 %v839
      %v841 = vpop.xlane.xlu0 %840
      %v842 = vsel %vm703, %v797, 0.0
      %843 = vadd.xlane.f32.xlu0 %v842
      %v844 = vpop.xlane.xlu0 %843
      %v845 = vsel %vm703, %v799, 0.0
      %846 = vadd.xlane.f32.xlu0 %v845
      %v847 = vpop.xlane.xlu0 %846
      %v848 = vrcp.pop %v802
      %v849 = vmul.f32 %v802, %v848
      %v850 = vsub.f32 1.0, %v849
      %v851 = vmul.f32 %v848, %v850
      %v852 = vadd.f32 %v848, %v851
      %vm853 = vweird.f32 %v802
      %vm854 = vweird.f32 %v848
      %vm855 = vmor %vm853, %vm854
      %v856 = vsel %vm855, %v848, %v852
      %v857 = vand.u32 2147483647, %v802
      %vm858 = vcmp.eq.f32.partialorder %v857, 8.507059e+37
      %v859 = vand.u32 %v802, 2147483648
      %v860 = vor.u32 1.1754944e-38, %v859
      %v861 = vsel %vm858, %v860, %v856
      %v862 = vmul.f32 %v769, %v861
      %v863 = vrcp.pop %v805
      %v864 = vmul.f32 %v805, %v863
      %v865 = vsub.f32 1.0, %v864
      %v866 = vmul.f32 %v863, %v865
      %v867 = vadd.f32 %v863, %v866
      %vm868 = vweird.f32 %v805
      %vm869 = vweird.f32 %v863
      %vm870 = vmor %vm868, %vm869
      %v871 = vsel %vm870, %v863, %v867
      %v872 = vand.u32 2147483647, %v805
      %vm873 = vcmp.eq.f32.partialorder %v872, 8.507059e+37
      %v874 = vand.u32 %v805, 2147483648
      %v875 = vor.u32 1.1754944e-38, %v874
      %v876 = vsel %vm873, %v875, %v871
      %v877 = vmul.f32 %v771, %v876
      %v878 = vrcp.pop %v808
      %v879 = vmul.f32 %v808, %v878
      %v880 = vsub.f32 1.0, %v879
      %v881 = vmul.f32 %v878, %v880
      %v882 = vadd.f32 %v878, %v881
      %vm883 = vweird.f32 %v808
      %vm884 = vweird.f32 %v878
      %vm885 = vmor %vm883, %vm884
      %v886 = vsel %vm885, %v878, %v882
      %v887 = vand.u32 2147483647, %v808
      %vm888 = vcmp.eq.f32.partialorder %v887, 8.507059e+37
      %v889 = vand.u32 %v808, 2147483648
      %v890 = vor.u32 1.1754944e-38, %v889
      %v891 = vsel %vm888, %v890, %v886
      %v892 = vmul.f32 %v773, %v891
      %v893 = vrcp.pop %v811
      %v894 = vmul.f32 %v811, %v893
      %v895 = vsub.f32 1.0, %v894
      %v896 = vmul.f32 %v893, %v895
      %v897 = vadd.f32 %v893, %v896
      %vm898 = vweird.f32 %v811
      %vm899 = vweird.f32 %v893
      %vm900 = vmor %vm898, %vm899
      %v901 = vsel %vm900, %v893, %v897
      %v902 = vand.u32 2147483647, %v811
      %vm903 = vcmp.eq.f32.partialorder %v902, 8.507059e+37
      %v904 = vand.u32 %v811, 2147483648
      %v905 = vor.u32 1.1754944e-38, %v904
      %v906 = vsel %vm903, %v905, %v901
      %v907 = vmul.f32 %v775, %v906
      %v908 = vrcp.pop %v814
      %v909 = vmul.f32 %v814, %v908
      %v910 = vsub.f32 1.0, %v909
      %v911 = vmul.f32 %v908, %v910
      %v912 = vadd.f32 %v908, %v911
      %vm913 = vweird.f32 %v814
      %vm914 = vweird.f32 %v908
      %vm915 = vmor %vm913, %vm914
      %v916 = vsel %vm915, %v908, %v912
      %v917 = vand.u32 2147483647, %v814
      %vm918 = vcmp.eq.f32.partialorder %v917, 8.507059e+37
      %v919 = vand.u32 %v814, 2147483648
      %v920 = vor.u32 1.1754944e-38, %v919
      %v921 = vsel %vm918, %v920, %v916
      %v922 = vmul.f32 %v777, %v921
      %v923 = vrcp.pop %v817
      %v924 = vmul.f32 %v817, %v923
      %v925 = vsub.f32 1.0, %v924
      %v926 = vmul.f32 %v923, %v925
      %v927 = vadd.f32 %v923, %v926
      %vm928 = vweird.f32 %v817
      %vm929 = vweird.f32 %v923
      %vm930 = vmor %vm928, %vm929
      %v931 = vsel %vm930, %v923, %v927
      %v932 = vand.u32 2147483647, %v817
      %vm933 = vcmp.eq.f32.partialorder %v932, 8.507059e+37
      %v934 = vand.u32 %v817, 2147483648
      %v935 = vor.u32 1.1754944e-38, %v934
      %v936 = vsel %vm933, %v935, %v931
      %v937 = vmul.f32 %v779, %v936
      %v938 = vrcp.pop %v820
      %v939 = vmul.f32 %v820, %v938
      %v940 = vsub.f32 1.0, %v939
      %v941 = vmul.f32 %v938, %v940
      %v942 = vadd.f32 %v938, %v941
      %vm943 = vweird.f32 %v820
      %vm944 = vweird.f32 %v938
      %vm945 = vmor %vm943, %vm944
      %v946 = vsel %vm945, %v938, %v942
      %v947 = vand.u32 2147483647, %v820
      %vm948 = vcmp.eq.f32.partialorder %v947, 8.507059e+37
      %v949 = vand.u32 %v820, 2147483648
      %v950 = vor.u32 1.1754944e-38, %v949
      %v951 = vsel %vm948, %v950, %v946
      %v952 = vmul.f32 %v781, %v951
      %v953 = vrcp.pop %v823
      %v954 = vmul.f32 %v823, %v953
      %v955 = vsub.f32 1.0, %v954
      %v956 = vmul.f32 %v953, %v955
      %v957 = vadd.f32 %v953, %v956
      %vm958 = vweird.f32 %v823
      %vm959 = vweird.f32 %v953
      %vm960 = vmor %vm958, %vm959
      %v961 = vsel %vm960, %v953, %v957
      %v962 = vand.u32 2147483647, %v823
      %vm963 = vcmp.eq.f32.partialorder %v962, 8.507059e+37
      %v964 = vand.u32 %v823, 2147483648
      %v965 = vor.u32 1.1754944e-38, %v964
      %v966 = vsel %vm963, %v965, %v961
      %v967 = vmul.f32 %v783, %v966
      %v968 = vrcp.pop %v826
      %v969 = vmul.f32 %v826, %v968
      %v970 = vsub.f32 1.0, %v969
      %v971 = vmul.f32 %v968, %v970
      %v972 = vadd.f32 %v968, %v971
      %vm973 = vweird.f32 %v826
      %vm974 = vweird.f32 %v968
      %vm975 = vmor %vm973, %vm974
      %v976 = vsel %vm975, %v968, %v972
      %v977 = vand.u32 2147483647, %v826
      %vm978 = vcmp.eq.f32.partialorder %v977, 8.507059e+37
      %v979 = vand.u32 %v826, 2147483648
      %v980 = vor.u32 1.1754944e-38, %v979
      %v981 = vsel %vm978, %v980, %v976
      %v982 = vmul.f32 %v785, %v981
      %v983 = vrcp.pop %v829
      %v984 = vmul.f32 %v829, %v983
      %v985 = vsub.f32 1.0, %v984
      %v986 = vmul.f32 %v983, %v985
      %v987 = vadd.f32 %v983, %v986
      %vm988 = vweird.f32 %v829
      %vm989 = vweird.f32 %v983
      %vm990 = vmor %vm988, %vm989
      %v991 = vsel %vm990, %v983, %v987
      %v992 = vand.u32 2147483647, %v829
      %vm993 = vcmp.eq.f32.partialorder %v992, 8.507059e+37
      %v994 = vand.u32 %v829, 2147483648
      %v995 = vor.u32 1.1754944e-38, %v994
      %v996 = vsel %vm993, %v995, %v991
      %v997 = vmul.f32 %v787, %v996
      %v998 = vrcp.pop %v832
      %v999 = vmul.f32 %v832, %v998
      %v1000 = vsub.f32 1.0, %v999
      %v1001 = vmul.f32 %v998, %v1000
      %v1002 = vadd.f32 %v998, %v1001
      %vm1003 = vweird.f32 %v832
      %vm1004 = vweird.f32 %v998
      %vm1005 = vmor %vm1003, %vm1004
      %v1006 = vsel %vm1005, %v998, %v1002
      %v1007 = vand.u32 2147483647, %v832
      %vm1008 = vcmp.eq.f32.partialorder %v1007, 8.507059e+37
      %v1009 = vand.u32 %v832, 2147483648
      %v1010 = vor.u32 1.1754944e-38, %v1009
      %v1011 = vsel %vm1008, %v1010, %v1006
      %v1012 = vmul.f32 %v789, %v1011
      %v1013 = vrcp.pop %v835
      %v1014 = vmul.f32 %v835, %v1013
      %v1015 = vsub.f32 1.0, %v1014
      %v1016 = vmul.f32 %v1013, %v1015
      %v1017 = vadd.f32 %v1013, %v1016
      %vm1018 = vweird.f32 %v835
      %vm1019 = vweird.f32 %v1013
      %vm1020 = vmor %vm1018, %vm1019
      %v1021 = vsel %vm1020, %v1013, %v1017
      %v1022 = vand.u32 2147483647, %v835
      %vm1023 = vcmp.eq.f32.partialorder %v1022, 8.507059e+37
      %v1024 = vand.u32 %v835, 2147483648
      %v1025 = vor.u32 1.1754944e-38, %v1024
      %v1026 = vsel %vm1023, %v1025, %v1021
      %v1027 = vmul.f32 %v791, %v1026
      %v1028 = vrcp.pop %v838
      %v1029 = vmul.f32 %v838, %v1028
      %v1030 = vsub.f32 1.0, %v1029
      %v1031 = vmul.f32 %v1028, %v1030
      %v1032 = vadd.f32 %v1028, %v1031
      %vm1033 = vweird.f32 %v838
      %vm1034 = vweird.f32 %v1028
      %vm1035 = vmor %vm1033, %vm1034
      %v1036 = vsel %vm1035, %v1028, %v1032
      %v1037 = vand.u32 2147483647, %v838
      %vm1038 = vcmp.eq.f32.partialorder %v1037, 8.507059e+37
      %v1039 = vand.u32 %v838, 2147483648
      %v1040 = vor.u32 1.1754944e-38, %v1039
      %v1041 = vsel %vm1038, %v1040, %v1036
      %v1042 = vmul.f32 %v793, %v1041
      %v1043 = vrcp.pop %v841
      %v1044 = vmul.f32 %v841, %v1043
      %v1045 = vsub.f32 1.0, %v1044
      %v1046 = vmul.f32 %v1043, %v1045
      %v1047 = vadd.f32 %v1043, %v1046
      %vm1048 = vweird.f32 %v841
      %vm1049 = vweird.f32 %v1043
      %vm1050 = vmor %vm1048, %vm1049
      %v1051 = vsel %vm1050, %v1043, %v1047
      %v1052 = vand.u32 2147483647, %v841
      %vm1053 = vcmp.eq.f32.partialorder %v1052, 8.507059e+37
      %v1054 = vand.u32 %v841, 2147483648
      %v1055 = vor.u32 1.1754944e-38, %v1054
      %v1056 = vsel %vm1053, %v1055, %v1051
      %v1057 = vmul.f32 %v795, %v1056
      %v1058 = vrcp.pop %v844
      %v1059 = vmul.f32 %v844, %v1058
      %v1060 = vsub.f32 1.0, %v1059
      %v1061 = vmul.f32 %v1058, %v1060
      %v1062 = vadd.f32 %v1058, %v1061
      %vm1063 = vweird.f32 %v844
      %vm1064 = vweird.f32 %v1058
      %vm1065 = vmor %vm1063, %vm1064
      %v1066 = vsel %vm1065, %v1058, %v1062
      %v1067 = vand.u32 2147483647, %v844
      %vm1068 = vcmp.eq.f32.partialorder %v1067, 8.507059e+37
      %v1069 = vand.u32 %v844, 2147483648
      %v1070 = vor.u32 1.1754944e-38, %v1069
      %v1071 = vsel %vm1068, %v1070, %v1066
      %v1072 = vmul.f32 %v797, %v1071
      %v1073 = vrcp.pop %v847
      %v1074 = vmul.f32 %v847, %v1073
      %v1075 = vsub.f32 1.0, %v1074
      %v1076 = vmul.f32 %v1073, %v1075
      %v1077 = vadd.f32 %v1073, %v1076
      %vm1078 = vweird.f32 %v847
      %vm1079 = vweird.f32 %v1073
      %vm1080 = vmor %vm1078, %vm1079
      %v1081 = vsel %vm1080, %v1073, %v1077
      %v1082 = vand.u32 2147483647, %v847
      %vm1083 = vcmp.eq.f32.partialorder %v1082, 8.507059e+37
      %v1084 = vand.u32 %v847, 2147483648
      %v1085 = vor.u32 1.1754944e-38, %v1084
      %v1086 = vsel %vm1083, %v1085, %v1081
      %v1087 = vmul.f32 %v799, %v1086
      %1088 = vst.msk [vmem:[%s280] sm:$0xff] %vm703, %v862
      %1089 = vst.msk [vmem:[%s280 + $0x8] sm:$0xff] %vm703, %v877
      %1090 = vst.msk [vmem:[%s280 + $0x10] sm:$0xff] %vm703, %v892
      %1091 = vst.msk [vmem:[%s280 + $0x18] sm:$0xff] %vm703, %v907
      %1092 = vst.msk [vmem:[%s280 + $0x20] sm:$0xff] %vm703, %v922
      %1093 = vst.msk [vmem:[%s280 + $0x28] sm:$0xff] %vm703, %v937
      %1094 = vst.msk [vmem:[%s280 + $0x30] sm:$0xff] %vm703, %v952
      %1095 = vst.msk [vmem:[%s280 + $0x38] sm:$0xff] %vm703, %v967
      %1096 = vst.msk [vmem:[%s280 + $0x40] sm:$0xff] %vm703, %v982
      %1097 = vst.msk [vmem:[%s280 + $0x48] sm:$0xff] %vm703, %v997
      %1098 = vst.msk [vmem:[%s280 + $0x50] sm:$0xff] %vm703, %v1012
      %1099 = vst.msk [vmem:[%s280 + $0x58] sm:$0xff] %vm703, %v1027
      %1100 = vst.msk [vmem:[%s280 + $0x60] sm:$0xff] %vm703, %v1042
      %1101 = vst.msk [vmem:[%s280 + $0x68] sm:$0xff] %vm703, %v1057
      %1102 = vst.msk [vmem:[%s280 + $0x70] sm:$0xff] %vm703, %v1072
      %1103 = vst.msk [vmem:[%s280 + $0x78] sm:$0xff] %vm703, %v1087
      %s1104 = smul.u32 16, %s18
      %p1105 = scmp.lt.s32.totalorder %s1104, 31
      %s1106 = scalar_select %p1105, %s1104, 31
      %s1107 = smul.addr %s1106, 8
      %s1108 = scalar_lea.vmem %s7, %s1107
      // Predicated region
      $region49: #{tpu_custom_call.1} parent=47 // pred_check
        %p1109 = pneg %p188
      $region50: #{tpu_custom_call.1} parent=47 // pred_check_branch
        %1111 = sbr.rel (%p1109) target = $region52
      $region51: #{tpu_custom_call.1} parent=47 // pred_region
        %s1112 = smul.u32 16, %s18
      $region52: #{tpu_custom_call.1} parent=47 // pred_fallthru
        _
    $region48: #{tpu_custom_call.1} parent=5 // pred_fallthru
      _
    %p1113 = scmp.le.s32.totalorder 2, %s13
    // Predicated region
    $region53: #{tpu_custom_call.1} parent=5 // pred_check
      %p1114 = pneg %p1113
    $region54: #{tpu_custom_call.1} parent=5 // pred_check_branch
      %1116 = sbr.rel (%p1114) target = $region56
    $region55: #{tpu_custom_call.1} parent=5 // pred_region
      %s1117 = ssub.s32 %s13, 2
      // Predicated region
      $region57: #{tpu_custom_call.1} parent=55 // pred_check
        %p1118 = pneg %p194
      $region58: #{tpu_custom_call.1} parent=55 // pred_check_branch
        %1120 = sbr.rel (%p1118) target = $region60
      $region59: #{tpu_custom_call.1} parent=55 // pred_region
        %s1121 = smul.u32 16, %s19
        %p1122 = scmp.lt.s32.totalorder %s1121, 31
        %s1123 = scalar_select %p1122, %s1121, 31
        %s1124 = smul.addr %s1123, 8
        %s1125 = scalar_lea.vmem %s7, %s1124
      $region60: #{tpu_custom_call.1} parent=55 // pred_fallthru
        _
    $region56: #{tpu_custom_call.1} parent=5 // pred_fallthru
      _
  $region6: #{tpu_custom_call.1} parent=0 // loop_footer
    %s17 = sadd.s32 1, %s13
  $region7: #{tpu_custom_call.1} parent=0 // loop_footer_branch
    %12 = sbr.rel target = $region3
  $region8: #{tpu_custom_call.1} parent=0 // loop_exit
    _

</llo_original>
